<compile_context>
chip_gen: v6e
topology: v6e:2x2x1
jax: 0.10.0
libtpu: 0.0.40
codegen_flags: <defaults>
</compile_context>

<pallas_src>
import functools

import jax
import jax.numpy as jnp
from jax.experimental import pallas as pl
from jax.experimental.pallas import tpu as pltpu

_PD_EPS = 1e-6          # F.pairwise_distance default eps (added to the difference)
_NUM_CORE_SPLITS = 2    # leading "parallel" grid axis; uses both TCs on v7x,
                        # harmless (serial) on 1-TC v5e/v6e


def _contrastive_kernel(f1_ref, f2_ref, y_ref, out_ref, acc_ref, *,
                        margin, total_rows, tile_rows):
    c = pl.program_id(0)                       # core-split index
    i = pl.program_id(1)                       # streaming (reduction) index
    tiles_per_core = pl.num_programs(1)
    g = c * tiles_per_core + i                 # global tile index (may overshoot; masked)

    @pl.when(i == 0)
    def _init():
        acc_ref[...] = jnp.zeros_like(acc_ref)

    f1 = f1_ref[...].astype(jnp.float32)       # (TB, D)
    f2 = f2_ref[...].astype(jnp.float32)       # (TB, D)
    y = y_ref[...].astype(jnp.float32)         # (TB, 1) -- upcast here, not in wrapper

    diff = f1 - f2 + _PD_EPS
    d2 = jnp.sum(diff * diff, axis=1, keepdims=True)      # (TB, 1)
    d = jnp.sqrt(d2)
    hinge = jnp.maximum(margin - d, 0.0)
    loss = (1.0 - y) * d2 + y * (hinge * hinge)            # (TB, 1), f32

    needs_mask = (g + 1) * tile_rows > total_rows          # tile overhangs the batch?

    @pl.when(jnp.logical_not(needs_mask))
    def _accumulate_full():
        acc_ref[...] += loss

    @pl.when(needs_mask)
    def _accumulate_masked():
        row = jax.lax.broadcasted_iota(jnp.int32, loss.shape, 0) + g * tile_rows
        # keep this a select (not a multiply): padded rows may contain NaN/Inf.
        acc_ref[...] += jnp.where(row < total_rows, loss, 0.0)

    @pl.when(i == tiles_per_core - 1)
    def _finalize():
        # Single cross-sublane reduce per core; mean taken in the wrapper.
        out_ref[...] = jnp.sum(acc_ref[...], keepdims=True).reshape(1, 1, 1)


def _round_down(x, m):
    return max(m, (x // m) * m)


def _round_up(x, m):
    return ((x + m - 1) // m) * m


def _pick_tile_rows(B, D, f_itemsize, l_itemsize):
    """Byte-based tile sizing: big streaming blocks, bounded VMEM footprint."""
    # Sublane packing of the streamed dtypes: 8 (4B), 16 (2B), 32 (1B).
    pack = max(8, 32 // max(f_itemsize, 1), 32 // max(l_itemsize, 1))
    # VMEM bytes consumed per batch row by the pipeline:
    #   2 feature inputs x 2 pipeline buffers, plus the lane-padded (TB,1)
    #   label blocks (x2 buffers) and the (TB,1) f32 accumulator (Mosaic pads
    #   the 1-wide lane dim of those buffers to 128 lanes).
    per_row = (2 * 2 * D * f_itemsize) + (2 * 128 * max(l_itemsize, 1)) + (128 * 4)
    vmem_budget = 12 << 20          # keep the pipeline well inside scoped VMEM on all gens
    target_block = 4 << 20          # ~1-4 MiB feature blocks = measured HBM-roofline sweet spot
    tb = min(vmem_budget // per_row,
             max(1, target_block // max(1, D * f_itemsize)))
    if tb >= B:
        return B                    # single full-array tile
    return _round_down(tb, pack)


def contrastive_loss(features1, features2, labels, margin=2.0, tile_rows=None):
    """Pallas TPU implementation of ContrastiveLoss(margin).forward."""
    assert features1.shape == features2.shape and features1.ndim == 2
    B, D = features1.shape
    labels = jnp.asarray(labels).reshape(-1)
    assert labels.shape[0] == B
    if labels.dtype == jnp.bool_:
        labels = labels.astype(jnp.float32)
    labels2d = labels.reshape(B, 1)          # native dtype; upcast inside the kernel

    f_size = jnp.dtype(features1.dtype).itemsize
    l_size = jnp.dtype(labels2d.dtype).itemsize
    if tile_rows is None:
        tile_rows = _pick_tile_rows(B, D, f_size, l_size)
    tile_rows = int(min(tile_rows, B))

    num_tiles = pl.cdiv(B, tile_rows)
    num_splits = _NUM_CORE_SPLITS if num_tiles >= 2 else 1
    tiles_per_core = pl.cdiv(num_tiles, num_splits)

    # Clamp the global tile index so overshoot tiles (when
    # num_splits * tiles_per_core > num_tiles) re-read the last valid block;
    # their contribution is fully masked to zero inside the kernel.
    def tile_map(c, i):
        g = jnp.minimum(c * tiles_per_core + i, num_tiles - 1)
        return (g, 0)

    feat_spec = pl.BlockSpec((tile_rows, D), tile_map)
    lbl_spec = pl.BlockSpec((tile_rows, 1), tile_map)
    # NOTE: pipeline_mode=pl.Buffered(3) on feat_spec is a v7x-only sweep
    # candidate if the DMA is still exposed after block enlargement.

    kernel = functools.partial(
        _contrastive_kernel,
        margin=float(margin), total_rows=int(B), tile_rows=int(tile_rows))

    # Honest, generation-safe VMEM request: actual need + headroom, <= 28 MiB
    # (v7x has only 64 MiB physical / 32 MiB scoped per TensorCore).
    feat_block_bytes = tile_rows * D * f_size
    lbl_block_bytes = _round_up(tile_rows, 8) * 128 * l_size
    acc_bytes = _round_up(tile_rows, 8) * 128 * 4
    need = 2 * 2 * feat_block_bytes + 2 * lbl_block_bytes + acc_bytes
    vmem_limit = int(min(28 << 20, max(16 << 20, need + (6 << 20))))

    partials = pl.pallas_call(
        kernel,
        out_shape=jax.ShapeDtypeStruct((num_splits, 1, 1), jnp.float32),
        grid=(num_splits, tiles_per_core),
        in_specs=[feat_spec, feat_spec, lbl_spec],
        out_specs=pl.BlockSpec((1, 1, 1), lambda c, i: (c, 0, 0)),
        scratch_shapes=[pltpu.VMEM((tile_rows, 1), jnp.float32)],
        compiler_params=pltpu.CompilerParams(
            dimension_semantics=("parallel", "arbitrary"),
            vmem_limit_bytes=vmem_limit),
    )(features1, features2, labels2d)

    return jnp.sum(partials) * (1.0 / B)


def _reference(features1, features2, labels, margin=2.0):
    # Pure-JAX mirror of the PyTorch semantics.
    f1 = features1.astype(jnp.float32)
    f2 = features2.astype(jnp.float32)
    y = labels.astype(jnp.float32)
    d = jnp.sqrt(jnp.sum((f1 - f2 + _PD_EPS) ** 2, axis=1))
    loss = (1.0 - y) * d**2 + y * jnp.maximum(margin - d, 0.0) ** 2
    return jnp.mean(loss)


if __name__ == "__main__":
    key = jax.random.PRNGKey(0)
    k1, k2, k3 = jax.random.split(key, 3)

    # Small shapes; B=20 with tile_rows=8 exercises the multi-tile streaming
    # path, the 2-way core split, partial-tile masking and overshoot-tile
    # clamping.  The default call exercises the single-full-tile path.
    B, D = 20, 32
    features1 = jax.random.normal(k1, (B, D), dtype=jnp.float32)
    features2 = jax.random.normal(k2, (B, D), dtype=jnp.float32)
    labels = jax.random.bernoulli(k3, p=0.5, shape=(B,)).astype(jnp.float32)

    ref = _reference(features1, features2, labels, margin=2.0)

    loss_tiled = contrastive_loss(features1, features2, labels, margin=2.0, tile_rows=8)
    loss_tiled = jax.block_until_ready(loss_tiled)
    assert jnp.allclose(loss_tiled, ref, atol=1e-5, rtol=1e-5), (loss_tiled, ref)

    loss_auto = contrastive_loss(features1, features2, labels, margin=2.0)
    loss_auto = jax.block_until_ready(loss_auto)
    assert jnp.allclose(loss_auto, ref, atol=1e-5, rtol=1e-5), (loss_auto, ref)

    print("KERNEL_OK")
</pallas_src>

<mosaic_0001>
module attributes {stable_mosaic.version = 11 : i64} {
  func.func @_contrastive_kernel(%arg0: i32, %arg1: i32, %arg2: memref<8x32xf32, #tpu.memory_space<vmem>>, %arg3: memref<8x32xf32, #tpu.memory_space<vmem>>, %arg4: memref<8x1xf32, #tpu.memory_space<vmem>>, %arg5: memref<1x1x1xf32, #tpu.memory_space<vmem>>, %arg6: memref<8x1xf32, #tpu.memory_space<vmem>>) attributes {dimension_semantics = [#tpu.dimension_semantics<parallel>, #tpu.dimension_semantics<arbitrary>], iteration_bounds = array<i64: 2, 2>, scalar_prefetch = 0 : i64, scratch_operands = 1 : i64, tpu.core_type = #tpu.core_type<tc>, window_params = [{transform_indices = @transform_0, window_bounds = array<i64: 8, 32>}, {transform_indices = @transform_1, window_bounds = array<i64: 8, 32>}, {transform_indices = @transform_2, window_bounds = array<i64: 8, 1>}, {transform_indices = @transform_3, window_bounds = array<i64: 1, 1, 1>}]} {
    %c2_i32 = arith.constant 2 : i32
    %0 = arith.muli %arg0, %c2_i32 : i32
    %1 = arith.addi %0, %arg1 : i32
    %c0_i32 = arith.constant 0 : i32
    %2 = arith.cmpi eq, %arg1, %c0_i32 : i32
    %3 = arith.extui %2 : i1 to i32
    %c0_i32_0 = arith.constant 0 : i32
    %4 = arith.cmpi ne, %3, %c0_i32_0 : i32
    scf.if %4 {
      %cst_14 = arith.constant 0.000000e+00 : f32
      %36 = vector.broadcast %cst_14 : f32 to vector<8x1xf32>
      %c0_15 = arith.constant 0 : index
      %c0_16 = arith.constant 0 : index
      %37 = vector.load %arg6[%c0_15, %c0_16] : memref<8x1xf32, #tpu.memory_space<vmem>>, vector<8x1xf32>
      tpu.vector_store %arg6[%c0_15, %c0_16], %36 {strides = array<i32>} : memref<8x1xf32, #tpu.memory_space<vmem>>, vector<8x1xf32>,
    } else {
    }
    %c0 = arith.constant 0 : index
    %c0_1 = arith.constant 0 : index
    %5 = vector.load %arg2[%c0, %c0_1] : memref<8x32xf32, #tpu.memory_space<vmem>>, vector<8x32xf32>
    %c0_2 = arith.constant 0 : index
    %c0_3 = arith.constant 0 : index
    %6 = vector.load %arg3[%c0_2, %c0_3] : memref<8x32xf32, #tpu.memory_space<vmem>>, vector<8x32xf32>
    %c0_4 = arith.constant 0 : index
    %c0_5 = arith.constant 0 : index
    %7 = vector.load %arg4[%c0_4, %c0_5] : memref<8x1xf32, #tpu.memory_space<vmem>>, vector<8x1xf32>
    %8 = arith.subf %5, %6 : vector<8x32xf32>
    %cst = arith.constant 9.99999997E-7 : f32
    %9 = vector.broadcast %cst : f32 to vector<8x32xf32>
    %10 = arith.addf %8, %9 : vector<8x32xf32>
    %11 = arith.mulf %10, %10 : vector<8x32xf32>
    %cst_6 = arith.constant dense<0.000000e+00> : vector<8xf32>
    %12 = vector.multi_reduction <add>, %11, %cst_6 [1] : vector<8x32xf32> to vector<8xf32>
    %13 = vector.shape_cast %12 : vector<8xf32> to vector<8x1xf32>
    %14 = math.sqrt %13 : vector<8x1xf32>
    %cst_7 = arith.constant 2.000000e+00 : f32
    %15 = vector.broadcast %cst_7 : f32 to vector<8x1xf32>
    %16 = arith.subf %15, %14 : vector<8x1xf32>
    %cst_8 = arith.constant 0.000000e+00 : f32
    %17 = vector.broadcast %cst_8 : f32 to vector<8x1xf32>
    %18 = arith.maximumf %16, %17 : vector<8x1xf32>
    %cst_9 = arith.constant 1.000000e+00 : f32
    %19 = vector.broadcast %cst_9 : f32 to vector<8x1xf32>
    %20 = arith.subf %19, %7 : vector<8x1xf32>
    %21 = arith.mulf %20, %13 : vector<8x1xf32>
    %22 = arith.mulf %18, %18 : vector<8x1xf32>
    %23 = arith.mulf %7, %22 : vector<8x1xf32>
    %24 = arith.addf %21, %23 : vector<8x1xf32>
    %c1_i32 = arith.constant 1 : i32
    %25 = arith.addi %1, %c1_i32 : i32
    %c8_i32 = arith.constant 8 : i32
    %26 = arith.muli %25, %c8_i32 : i32
    %c20_i32 = arith.constant 20 : i32
    %27 = arith.cmpi sgt, %26, %c20_i32 : i32
    %true = arith.constant true
    %28 = arith.xori %27, %true : i1
    %29 = arith.extui %28 : i1 to i32
    %c0_i32_10 = arith.constant 0 : i32
    %30 = arith.cmpi ne, %29, %c0_i32_10 : i32
    scf.if %30 {
      %c0_14 = arith.constant 0 : index
      %c0_15 = arith.constant 0 : index
      %36 = vector.load %arg6[%c0_14, %c0_15] : memref<8x1xf32, #tpu.memory_space<vmem>>, vector<8x1xf32>
      %37 = arith.addf %36, %24 : vector<8x1xf32>
      %c0_16 = arith.constant 0 : index
      %c0_17 = arith.constant 0 : index
      %38 = vector.load %arg6[%c0_16, %c0_17] : memref<8x1xf32, #tpu.memory_space<vmem>>, vector<8x1xf32>
      tpu.vector_store %arg6[%c0_16, %c0_17], %37 {strides = array<i32>} : memref<8x1xf32, #tpu.memory_space<vmem>>, vector<8x1xf32>,
    } else {
    }
    %31 = arith.extui %27 : i1 to i32
    %c0_i32_11 = arith.constant 0 : i32
    %32 = arith.cmpi ne, %31, %c0_i32_11 : i32
    scf.if %32 {
      %36 = tpu.iota {dimensions = array<i32: 0>} : vector<8x1xi32>
      %c8_i32_14 = arith.constant 8 : i32
      %37 = arith.muli %1, %c8_i32_14 : i32
      %38 = vector.broadcast %37 : i32 to vector<8x1xi32>
      %39 = arith.addi %36, %38 : vector<8x1xi32>
      %c0_15 = arith.constant 0 : index
      %c0_16 = arith.constant 0 : index
      %40 = vector.load %arg6[%c0_15, %c0_16] : memref<8x1xf32, #tpu.memory_space<vmem>>, vector<8x1xf32>
      %c20_i32_17 = arith.constant 20 : i32
      %41 = vector.broadcast %c20_i32_17 : i32 to vector<8x1xi32>
      %42 = arith.cmpi slt, %39, %41 : vector<8x1xi32>
      %cst_18 = arith.constant 0.000000e+00 : f32
      %43 = vector.broadcast %cst_18 : f32 to vector<8x1xf32>
      %44 = arith.select %42, %24, %43 : vector<8x1xi1>, vector<8x1xf32>
      %45 = arith.addf %40, %44 : vector<8x1xf32>
      %c0_19 = arith.constant 0 : index
      %c0_20 = arith.constant 0 : index
      %46 = vector.load %arg6[%c0_19, %c0_20] : memref<8x1xf32, #tpu.memory_space<vmem>>, vector<8x1xf32>
      tpu.vector_store %arg6[%c0_19, %c0_20], %45 {strides = array<i32>} : memref<8x1xf32, #tpu.memory_space<vmem>>, vector<8x1xf32>,
    } else {
    }
    %c1_i32_12 = arith.constant 1 : i32
    %33 = arith.cmpi eq, %arg1, %c1_i32_12 : i32
    %34 = arith.extui %33 : i1 to i32
    %c0_i32_13 = arith.constant 0 : i32
    %35 = arith.cmpi ne, %34, %c0_i32_13 : i32
    scf.if %35 {
      %c0_14 = arith.constant 0 : index
      %c0_15 = arith.constant 0 : index
      %36 = vector.load %arg6[%c0_14, %c0_15] : memref<8x1xf32, #tpu.memory_space<vmem>>, vector<8x1xf32>
      %37 = vector.shape_cast %36 : vector<8x1xf32> to vector<1x8x1xf32>
      %cst_16 = arith.constant dense<0.000000e+00> : vector<1xf32>
      %38 = vector.multi_reduction <add>, %37, %cst_16 [1, 2] : vector<1x8x1xf32> to vector<1xf32>
      %39 = vector.shape_cast %38 : vector<1xf32> to vector<1x1x1xf32>
      %40 = vector.extract %39[0, 0, 0] : f32 from vector<1x1x1xf32>
      %41 = vector.broadcast %40 : f32 to vector<1x1xf32>
      %42 = vector.shape_cast %41 : vector<1x1xf32> to vector<1x1x1xf32>
      %c0_17 = arith.constant 0 : index
      %c0_18 = arith.constant 0 : index
      %c0_19 = arith.constant 0 : index
      %43 = vector.load %arg5[%c0_17, %c0_18, %c0_19] : memref<1x1x1xf32, #tpu.memory_space<vmem>>, vector<1x1x1xf32>
      tpu.vector_store %arg5[%c0_17, %c0_18, %c0_19], %42 {strides = array<i32>} : memref<1x1x1xf32, #tpu.memory_space<vmem>>, vector<1x1x1xf32>,
    } else {
    }
    return
  }
  func.func @transform_0(%arg0: i32, %arg1: i32) -> (i32, i32) {
    %c2_i32 = arith.constant 2 : i32
    %0 = arith.muli %arg0, %c2_i32 : i32
    %1 = arith.addi %0, %arg1 : i32
    %c2_i32_0 = arith.constant 2 : i32
    %2 = arith.minsi %1, %c2_i32_0 : i32
    %c0_i32 = arith.constant 0 : i32
    %c0_i32_1 = arith.constant 0 : i32
    return %2, %c0_i32 : i32, i32
  }
  func.func @transform_1(%arg0: i32, %arg1: i32) -> (i32, i32) {
    %c2_i32 = arith.constant 2 : i32
    %0 = arith.muli %arg0, %c2_i32 : i32
    %1 = arith.addi %0, %arg1 : i32
    %c2_i32_0 = arith.constant 2 : i32
    %2 = arith.minsi %1, %c2_i32_0 : i32
    %c0_i32 = arith.constant 0 : i32
    %c0_i32_1 = arith.constant 0 : i32
    return %2, %c0_i32 : i32, i32
  }
  func.func @transform_2(%arg0: i32, %arg1: i32) -> (i32, i32) {
    %c2_i32 = arith.constant 2 : i32
    %0 = arith.muli %arg0, %c2_i32 : i32
    %1 = arith.addi %0, %arg1 : i32
    %c2_i32_0 = arith.constant 2 : i32
    %2 = arith.minsi %1, %c2_i32_0 : i32
    %c0_i32 = arith.constant 0 : i32
    %c0_i32_1 = arith.constant 0 : i32
    return %2, %c0_i32 : i32, i32
  }
  func.func @transform_3(%arg0: i32, %arg1: i32) -> (i32, i32, i32) {
    %c0_i32 = arith.constant 0 : i32
    %c0_i32_0 = arith.constant 0 : i32
    %c0_i32_1 = arith.constant 0 : i32
    return %arg0, %c0_i32, %c0_i32_0 : i32, i32, i32
  }
}

</mosaic_0001>

<llo_original>
// kernel: tpu_custom_call.1
$region0: #{tpu_custom_call.1}
  #allocation0 [shape = 'u32[]', space=smem, size = 0x4, offset = 0x4, fixed_abs, tag = 'smem constant byte address 0x4 - core index']
  #allocation1 [shape = 'u32[144,128]{1,0:T(1,128)}', space=vmem, size = 0x12000, scoped, tag = 'internal scratch']
  #allocation2 [shape = 'f32[8,1]{1,0:T(8,128)}', space=vmem, size = 0x1000, scoped, tag = 'scratch operand']
  %s0 = inlined_call_operand.vmem [shape: f32[20,32], index: 0, kind: input, shape index: {}]
  %s1 = inlined_call_operand.hbm [shape: f32[20,32], index: 1, kind: input, shape index: {}]
  %s2 = inlined_call_operand.vmem [shape: f32[20,1], index: 2, kind: input, shape index: {}]
  %s3 = inlined_call_operand.vmem [shape: f32[2,1,1], index: 3, kind: output, shape index: {}]
  %s4 = sld [smem:[#allocation0]]
  $region65: #{tpu_custom_call.1} parent=0
    _
  %s6 = ssub.s32 1, %s4
  %s7 = scalar_select 0, %s6, %s4
  $region1: #{tpu_custom_call.1} parent=0
    #allocation3 [shape = 'u8[8192]{0}', space=vmem, size = 0x2000, scoped, tag = 'input window, operand 1']
    #allocation4 [shape = 's32[2]{0}', space=sflag, size = 0x8, scoped, tag = 'scoped memory for tpu_custom_call.1']
    %8 = vsyncpa [#allocation4], 0
    %s9 = scalar_lea.sflag [#allocation4], 1
    %10 = vsyncpa %s9, 0
    loop: start=0, step=1, limit=6
    $region2: #{tpu_custom_call.1} parent=1 // loop_pre_header
      _
    $region3: #{tpu_custom_call.1} parent=1 // loop_header
      %s12 = sphi 0, %s16
      %p13 = scmp.ge.s32.totalorder %s12, 6
      %s19 = sphi 0, %s31
      %s20 = sphi 0, %s27
      %s21 = sphi 0, %s19
      %s22 = sphi 0, %s20
      %s23 = sphi 0, %s21
      %s24 = sphi 0, %s22
      %s42 = sphi 0, %s44
      %s45 = sphi 0, %s42
      %s46 = sphi 0, %s45
      %s62 = sphi 0, %s46
      %s76 = sphi 0, %s78
      %s79 = sphi 0, %s76
      %s80 = sphi 0, %s79
      %s96 = sphi 0, %s80
      %s110 = sphi 0, %s112
      %s113 = sphi 0, %s110
      %s114 = sphi 0, %s113
      %s130 = sphi 0, %s114
      %s136 = sphi 0, %s138
      %s139 = sphi 0, %s136
      %s140 = sphi 0, %s139
      %s156 = sphi 0, %s140
    $region4: #{tpu_custom_call.1} parent=1 // loop_header_branch
      %15 = sbr.rel (%p13) target = $region8
    $region5: #{tpu_custom_call.1} parent=1 // loop_body
      %s17 = ssub.s32 %s12, 1
      %s18 = ssub.s32 %s12, 2
      %s25 = sadd.s32 1, %s20
      %p26 = scmp.ge.s32.totalorder %s25, 2
      %s27 = scalar_select %p26, 0, %s25
      %s28 = sadd.s32 1, %s19
      %s29 = scalar_select %p26, %s28, %s19
      %p30 = scmp.ge.s32.totalorder %s29, 2
      %s31 = scalar_select %p30, 0, %s29
      %s32 = smul.u32 %s19, 2
      %s33 = sadd.s32 %s32, %s20
      %p34 = scmp.lt.s32.totalorder %s33, 2
      %s35 = scalar_select %p34, %s33, 2
      %s36 = smul.u32 %s31, 2
      %s37 = sadd.s32 %s36, %s27
      %p38 = scmp.lt.s32.totalorder %s37, 2
      %s39 = scalar_select %p38, %s37, 2
      %s40 = ssub.s32 %s35, %s39
      %p41 = scmp.eq.s32.totalorder %s40, 0
      %s43 = sadd.s32 %s42, 1
      %s44 = scalar_select %p41, %s42, %s43
      %p47 = pneg %p41
      %p48 = scmp.eq.s32.totalorder %s12, 3
      %p49 = por %p47, %p48
      %p50 = scmp.ne.s32.totalorder %s42, %s45
      %p51 = scmp.eq.s32.totalorder %s12, 0
      %p52 = por %p50, %p51
      %p53 = scmp.ne.s32.totalorder %s42, %s45
      %p54 = scmp.eq.s32.totalorder %s17, 3
      %p55 = por %p53, %p54
      %p56 = scmp.ne.s32.totalorder %s45, %s46
      %p57 = scmp.eq.s32.totalorder %s17, 0
      %p58 = por %p56, %p57
      %p59 = scmp.ne.s32.totalorder %s45, %s46
      %p60 = scmp.eq.s32.totalorder %s18, 3
      %p61 = por %p59, %p60
      %p63 = scmp.ne.s32.totalorder %s46, %s62
      %p64 = scmp.eq.s32.totalorder %s18, 0
      %p65 = por %p63, %p64
      %s66 = smul.u32 %s19, 2
      %s67 = sadd.s32 %s66, %s20
      %p68 = scmp.lt.s32.totalorder %s67, 2
      %s69 = scalar_select %p68, %s67, 2
      %s70 = smul.u32 %s31, 2
      %s71 = sadd.s32 %s70, %s27
      %p72 = scmp.lt.s32.totalorder %s71, 2
      %s73 = scalar_select %p72, %s71, 2
      %s74 = ssub.s32 %s69, %s73
      %p75 = scmp.eq.s32.totalorder %s74, 0
      %s77 = sadd.s32 %s76, 1
      %s78 = scalar_select %p75, %s76, %s77
      %p81 = pneg %p75
      %p82 = scmp.eq.s32.totalorder %s12, 3
      %p83 = por %p81, %p82
      %p84 = scmp.ne.s32.totalorder %s76, %s79
      %p85 = scmp.eq.s32.totalorder %s12, 0
      %p86 = por %p84, %p85
      %p87 = scmp.ne.s32.totalorder %s76, %s79
      %p88 = scmp.eq.s32.totalorder %s17, 3
      %p89 = por %p87, %p88
      %p90 = scmp.ne.s32.totalorder %s79, %s80
      %p91 = scmp.eq.s32.totalorder %s17, 0
      %p92 = por %p90, %p91
      %p93 = scmp.ne.s32.totalorder %s79, %s80
      %p94 = scmp.eq.s32.totalorder %s18, 3
      %p95 = por %p93, %p94
      %p97 = scmp.ne.s32.totalorder %s80, %s96
      %p98 = scmp.eq.s32.totalorder %s18, 0
      %p99 = por %p97, %p98
      %s100 = smul.u32 %s19, 2
      %s101 = sadd.s32 %s100, %s20
      %p102 = scmp.lt.s32.totalorder %s101, 2
      %s103 = scalar_select %p102, %s101, 2
      %s104 = smul.u32 %s31, 2
      %s105 = sadd.s32 %s104, %s27
      %p106 = scmp.lt.s32.totalorder %s105, 2
      %s107 = scalar_select %p106, %s105, 2
      %s108 = ssub.s32 %s103, %s107
      %p109 = scmp.eq.s32.totalorder %s108, 0
      %s111 = sadd.s32 %s110, 1
      %s112 = scalar_select %p109, %s110, %s111
      %p115 = pneg %p109
      %p116 = scmp.eq.s32.totalorder %s12, 3
      %p117 = por %p115, %p116
      %p118 = scmp.ne.s32.totalorder %s110, %s113
      %p119 = scmp.eq.s32.totalorder %s12, 0
      %p120 = por %p118, %p119
      %p121 = scmp.ne.s32.totalorder %s110, %s113
      %p122 = scmp.eq.s32.totalorder %s17, 3
      %p123 = por %p121, %p122
      %p124 = scmp.ne.s32.totalorder %s113, %s114
      %p125 = scmp.eq.s32.totalorder %s17, 0
      %p126 = por %p124, %p125
      %p127 = scmp.ne.s32.totalorder %s113, %s114
      %p128 = scmp.eq.s32.totalorder %s18, 3
      %p129 = por %p127, %p128
      %p131 = scmp.ne.s32.totalorder %s114, %s130
      %p132 = scmp.eq.s32.totalorder %s18, 0
      %p133 = por %p131, %p132
      %s134 = ssub.s32 %s19, %s31
      %p135 = scmp.eq.s32.totalorder %s134, 0
      %s137 = sadd.s32 %s136, 1
      %s138 = scalar_select %p135, %s136, %s137
      %p141 = pneg %p135
      %p142 = scmp.eq.s32.totalorder %s12, 3
      %p143 = por %p141, %p142
      %p144 = scmp.ne.s32.totalorder %s136, %s139
      %p145 = scmp.eq.s32.totalorder %s12, 0
      %p146 = por %p144, %p145
      %p147 = scmp.ne.s32.totalorder %s136, %s139
      %p148 = scmp.eq.s32.totalorder %s17, 3
      %p149 = por %p147, %p148
      %p150 = scmp.ne.s32.totalorder %s139, %s140
      %p151 = scmp.eq.s32.totalorder %s17, 0
      %p152 = por %p150, %p151
      %p153 = scmp.ne.s32.totalorder %s139, %s140
      %p154 = scmp.eq.s32.totalorder %s18, 3
      %p155 = por %p153, %p154
      %p157 = scmp.ne.s32.totalorder %s140, %s156
      %p158 = scmp.eq.s32.totalorder %s18, 0
      %p159 = por %p157, %p158
      %p160 = scmp.le.s32.totalorder 1, %s12
      %p161 = scmp.lt.s32.totalorder %s12, 5
      %p162 = pnand %p160, %p161
      %p163 = pneg %p162
      // Predicated region
      $region9: #{tpu_custom_call.1} parent=5 // pred_check
        _
      $region10: #{tpu_custom_call.1} parent=5 // pred_check_branch
        %165 = sbr.rel (%p162) target = $region12
      $region11: #{tpu_custom_call.1} parent=5 // pred_region
        %s166 = ssub.s32 %s12, 1
      $region12: #{tpu_custom_call.1} parent=5 // pred_fallthru
        _
      %p167 = scmp.lt.s32.totalorder %s12, 4
      // Predicated region
      $region13: #{tpu_custom_call.1} parent=5 // pred_check
        %p168 = pneg %p167
      $region14: #{tpu_custom_call.1} parent=5 // pred_check_branch
        %170 = sbr.rel (%p168) target = $region16
      $region15: #{tpu_custom_call.1} parent=5 // pred_region
        // Predicated region
        $region17: #{tpu_custom_call.1} parent=15 // pred_check
          %p171 = pneg %p52
        $region18: #{tpu_custom_call.1} parent=15 // pred_check_branch
          %173 = sbr.rel (%p171) target = $region20
        $region19: #{tpu_custom_call.1} parent=15 // pred_region
          %s174 = smul.u32 %s19, 2
          %s175 = sadd.s32 %s174, %s20
          %p176 = scmp.lt.s32.totalorder %s175, 2
          %s177 = scalar_select %p176, %s175, 2
          %p178 = scmp.lt.s32.totalorder %s177, 2
          %s179 = scalar_select %p178, %s177, 2
          %s180 = smul.addr %s179, 8
          %s181 = scalar_lea.vmem %s0, %s180
          %s182 = smul.u32 %s19, 2
          %s183 = sadd.s32 %s182, %s20
          %p184 = scmp.lt.s32.totalorder %s183, 2
          %s185 = scalar_select %p184, %s183, 2
        $region20: #{tpu_custom_call.1} parent=15 // pred_fallthru
          _
        // Predicated region
        $region21: #{tpu_custom_call.1} parent=15 // pred_check
          %p186 = pneg %p86
        $region22: #{tpu_custom_call.1} parent=15 // pred_check_branch
          %188 = sbr.rel (%p186) target = $region24
        $region23: #{tpu_custom_call.1} parent=15 // pred_region
          %s189 = sand.u32 %s76, 1
          %s190 = scalar_lea.sflag [#allocation4], %s189
          %s191 = sand.u32 %s76, 1
          %s192 = smul.addr %s191, 8
          %s193 = scalar_lea.vmem [#allocation3], %s192
          %s194 = smul.u32 %s19, 2
          %s195 = sadd.s32 %s194, %s20
          %p196 = scmp.lt.s32.totalorder %s195, 2
          %s197 = scalar_select %p196, %s195, 2
          %s199 = ssub.s32 128, 128
          %200 = vsyncadd %s190, %s199
          %s201 = smul.addr %s197, 128
          %s202 = scalar_lea.hbm %s1, %s201
          %s204 = sshll.u32 %s193, 4
          %s205 = int_to_ptr.vmem [resolvable:$true] %s204
          %207 = dma.hbm_to_vmem [thread:$0]  %s202, 128, %s205, %s190
        $region24: #{tpu_custom_call.1} parent=15 // pred_fallthru
          _
        // Predicated region
        $region25: #{tpu_custom_call.1} parent=15 // pred_check
          %p208 = pneg %p120
        $region26: #{tpu_custom_call.1} parent=15 // pred_check_branch
          %210 = sbr.rel (%p208) target = $region28
        $region27: #{tpu_custom_call.1} parent=15 // pred_region
          %s211 = smul.u32 %s19, 2
          %s212 = sadd.s32 %s211, %s20
          %p213 = scmp.lt.s32.totalorder %s212, 2
          %s214 = scalar_select %p213, %s212, 2
          %p215 = scmp.lt.s32.totalorder %s214, 2
          %s216 = scalar_select %p215, %s214, 2
          %s217 = smul.addr %s216, 8
          %s218 = scalar_lea.vmem %s2, %s217
          %s219 = smul.u32 %s19, 2
          %s220 = sadd.s32 %s219, %s20
          %p221 = scmp.lt.s32.totalorder %s220, 2
          %s222 = scalar_select %p221, %s220, 2
        $region28: #{tpu_custom_call.1} parent=15 // pred_fallthru
          _
      $region16: #{tpu_custom_call.1} parent=5 // pred_fallthru
        _
      %p223 = scmp.le.s32.totalorder 1, %s12
      %p224 = scmp.lt.s32.totalorder %s12, 5
      %p225 = pnand %p223, %p224
      %p226 = pneg %p225
      // Predicated region
      $region29: #{tpu_custom_call.1} parent=5 // pred_check
        _
      $region30: #{tpu_custom_call.1} parent=5 // pred_check_branch
        %228 = sbr.rel (%p225) target = $region32
      $region31: #{tpu_custom_call.1} parent=5 // pred_region
        %s229 = ssub.s32 %s12, 1
        %s230 = sand.u32 %s79, 1
        %s231 = scalar_lea.sflag [#allocation4], %s230
        %s232 = sand.u32 %s79, 1
        %s233 = smul.addr %s232, 8
        %s234 = scalar_lea.vmem [#allocation3], %s233
        // Predicated region
        $region33: #{tpu_custom_call.1} parent=31 // pred_check
          %p235 = pneg %p92
        $region34: #{tpu_custom_call.1} parent=31 // pred_check_branch
          %237 = sbr.rel (%p235) target = $region36
        $region35: #{tpu_custom_call.1} parent=31 // pred_region
          %238 = dma.done %s231, 128
        $region36: #{tpu_custom_call.1} parent=31 // pred_fallthru
          _
        %s239 = smul.u32 %s21, 2
        %s240 = sadd.s32 %s239, %s22
        %p241 = scmp.lt.s32.totalorder %s240, 2
        %s242 = scalar_select %p241, %s240, 2
        %p243 = scmp.lt.s32.totalorder %s242, 2
        %s244 = scalar_select %p243, %s242, 2
        %s245 = smul.addr %s244, 8
        %s246 = scalar_lea.vmem %s0, %s245
        %p247 = pneg %p58
        %p248 = pneg %p55
        %s249 = sand.u32 %s79, 1
        %s250 = scalar_lea.sflag [#allocation4], %s249
        %s251 = sand.u32 %s79, 1
        %s252 = smul.addr %s251, 8
        %s253 = scalar_lea.vmem [#allocation3], %s252
        %p254 = pneg %p92
        %p255 = pneg %p89
        %s256 = smul.u32 %s21, 2
        %s257 = sadd.s32 %s256, %s22
        %p258 = scmp.lt.s32.totalorder %s257, 2
        %s259 = scalar_select %p258, %s257, 2
        %p260 = scmp.lt.s32.totalorder %s259, 2
        %s261 = scalar_select %p260, %s259, 2
        %s262 = smul.addr %s261, 8
        %s263 = scalar_lea.vmem %s2, %s262
        %p264 = pneg %p126
        %p265 = pneg %p123
        %p266 = pneg %p152
        %p267 = pneg %p149
        %p268 = scmp.lt.s32.totalorder %s21, 1
        %s269 = scalar_select %p268, %s21, 1
        %s270 = scalar_lea.vmem %s3, %s269
        %s271 = smul.u32 %s21, 2
        %s272 = sadd.s32 %s271, %s22
        %p273 = scmp.lt.s32.totalorder %s272, 2
        %s274 = scalar_select %p273, %s272, 2
        %p275 = scmp.lt.s32.totalorder %s274, 2
        %s276 = scalar_select %p275, %s274, 2
        %s277 = smul.addr %s276, 8
        %s278 = scalar_lea.vmem %s0, %s277
        %s279 = smul.u32 %s21, 2
        %s280 = sadd.s32 %s279, %s22
        %p281 = scmp.lt.s32.totalorder %s280, 2
        %s282 = scalar_select %p281, %s280, 2
        %s283 = smul.u32 %s21, 2
        %s284 = sadd.s32 %s283, %s22
        %p285 = scmp.lt.s32.totalorder %s284, 2
        %s286 = scalar_select %p285, %s284, 2
        %s287 = smul.u32 %s21, 2
        %s288 = sadd.s32 %s287, %s22
        %p289 = scmp.lt.s32.totalorder %s288, 2
        %s290 = scalar_select %p289, %s288, 2
        %p291 = scmp.lt.s32.totalorder %s290, 2
        %s292 = scalar_select %p291, %s290, 2
        %s293 = smul.addr %s292, 8
        %s294 = scalar_lea.vmem %s2, %s293
        %s295 = smul.u32 %s21, 2
        %s296 = sadd.s32 %s295, %s22
        %p297 = scmp.lt.s32.totalorder %s296, 2
        %s298 = scalar_select %p297, %s296, 2
        %p299 = scmp.lt.s32.totalorder %s21, 1
        %s300 = scalar_select %p299, %s21, 1
        %s301 = scalar_lea.vmem %s3, %s300
        %s302 = smul.u32 %s21, 2
        %s303 = sadd.s32 %s302, %s22
        %p304 = scmp.eq.s32.totalorder %s22, 0
        // Predicated region
        $region37: #{tpu_custom_call.1} parent=31 // pred_check
          %p305 = pneg %p304
        $region38: #{tpu_custom_call.1} parent=31 // pred_check_branch
          %307 = sbr.rel (%p305) target = $region40
        $region39: #{tpu_custom_call.1} parent=31 // pred_region
          %vm308 = vcmask 7168
          %309 = vst.msk [vmem:[#allocation2] sm:$0xff] %vm308, 0.0
        $region40: #{tpu_custom_call.1} parent=31 // pred_fallthru
          _
        %v310 = vld [vmem:[%s278] sm:$0xff]
        %v311 = vld [vmem:[%s234] sm:$0xff]
        %v312 = vld [vmem:[%s294] sm:$0xff]
        %v313 = vsub.f32 %v310, %v311
        %v314 = vadd.f32 %v313, 1e-06
        %v315 = vmul.f32 %v314, %v314
        %vm316 = vcmask 261120
        %v317 = vsel %vm316, %v315, 0.0
        %318 = vadd.xlane.f32.xlu0 %v317
        %v319 = vpop.xlane.xlu0 %318
        %v320 = vrsqrt.pop %v319
        %v321 = vmul.f32 %v319, %v320
        %vm322 = vcmp.eq.f32.partialorder %v319, inf
        %v323 = vsel %vm322, %v319, %v321
        %vm324 = vcmp.eq.f32.partialorder %v319, 0.0
        %v325 = vand.u32 %v319, 2147483648
        %v326 = vsel %vm324, %v325, %v323
        %v327 = vsub.f32 2.0, %v326
        %v328 = vmax.f32 %v327, 0.0
        %v329 = vsub.f32 1.0, %v312
        %v330 = vmul.f32 %v329, %v319
        %v331 = vmul.f32 %v328, %v328
        %v332 = vmul.f32 %v312, %v331
        %v333 = vadd.f32 %v330, %v332
        %s334 = sadd.s32 %s303, 1
        %s335 = smul.u32 %s334, 8
        %p336 = scmp.gt.s32.totalorder %s335, 20
        %p337 = scmp.le.s32.totalorder %s335, 20
        // Predicated region
        $region41: #{tpu_custom_call.1} parent=31 // pred_check
          %p338 = pneg %p337
        $region42: #{tpu_custom_call.1} parent=31 // pred_check_branch
          %340 = sbr.rel (%p338) target = $region44
        $region43: #{tpu_custom_call.1} parent=31 // pred_region
          %v341 = vld [vmem:[#allocation2] sm:$0xff]
          %v342 = vadd.f32 %v341, %v333
          %vm343 = vcmask 7168
          %344 = vst.msk [vmem:[#allocation2] sm:$0xff] %vm343, %v342
        $region44: #{tpu_custom_call.1} parent=31 // pred_fallthru
          _
        // Predicated region
        $region45: #{tpu_custom_call.1} parent=31 // pred_check
          %p345 = pneg %p336
        $region46: #{tpu_custom_call.1} parent=31 // pred_check_branch
          %347 = sbr.rel (%p345) target = $region48
        $region47: #{tpu_custom_call.1} parent=31 // pred_region
          %v348 = vlaneseq
          %v349 = vshrl.u32 %v348, 7
          %s350 = smul.u32 %s303, 8
          %v351 = vstv %s350
          %v352 = vadd.s32 %v349, %v351
          %v353 = vld [vmem:[#allocation2] sm:$0xff]
          %vm354 = vcmp.lt.s32.totalorder %v352, 20
          %v355 = vsel %vm354, %v333, 0.0
          %v356 = vadd.f32 %v353, %v355
          %vm357 = vcmask 7168
          %358 = vst.msk [vmem:[#allocation2] sm:$0xff] %vm357, %v356
        $region48: #{tpu_custom_call.1} parent=31 // pred_fallthru
          _
        %p359 = scmp.eq.s32.totalorder %s22, 1
        // Predicated region
        $region49: #{tpu_custom_call.1} parent=31 // pred_check
          %p360 = pneg %p359
        $region50: #{tpu_custom_call.1} parent=31 // pred_check_branch
          %362 = sbr.rel (%p360) target = $region52
        $region51: #{tpu_custom_call.1} parent=31 // pred_region
          %v363 = vld [vmem:[#allocation2] sm:$0xff]
          %vm364 = vcmask 7168
          %v365 = vsel %vm364, %v363, 0.0
          %366 = vadd.xlane.f32.xlu0 %v365
          %v367 = vpop.xlane.xlu0 %366
          %v368 = vrot.slane %v367, 4
          %v369 = vadd.f32 %v367, %v368
          %v370 = vrot.slane %v369, 2
          %v371 = vadd.f32 %v369, %v370
          %v372 = vrot.slane %v371, 1
          %v373 = vadd.f32 %v371, %v372
          %s374 = vtos %v373
          %v375 = vstv %s374
          %vm376 = vcmask 0
          %377 = vst.msk [vmem:[%s301] sm:$0x1] %vm376, %v375
        $region52: #{tpu_custom_call.1} parent=31 // pred_fallthru
          _
        %p378 = scmp.lt.s32.totalorder %s21, 1
        %s379 = scalar_select %p378, %s21, 1
        %s380 = scalar_lea.vmem %s3, %s379
        // Predicated region
        $region53: #{tpu_custom_call.1} parent=31 // pred_check
          %p381 = pneg %p149
        $region54: #{tpu_custom_call.1} parent=31 // pred_check_branch
          %383 = sbr.rel (%p381) target = $region56
        $region55: #{tpu_custom_call.1} parent=31 // pred_region
          _
        $region56: #{tpu_custom_call.1} parent=31 // pred_fallthru
          _
      $region32: #{tpu_custom_call.1} parent=5 // pred_fallthru
        _
      %p384 = scmp.le.s32.totalorder 2, %s12
      // Predicated region
      $region57: #{tpu_custom_call.1} parent=5 // pred_check
        %p385 = pneg %p384
      $region58: #{tpu_custom_call.1} parent=5 // pred_check_branch
        %387 = sbr.rel (%p385) target = $region60
      $region59: #{tpu_custom_call.1} parent=5 // pred_region
        %s388 = ssub.s32 %s12, 2
        // Predicated region
        $region61: #{tpu_custom_call.1} parent=59 // pred_check
          %p389 = pneg %p155
        $region62: #{tpu_custom_call.1} parent=59 // pred_check_branch
          %391 = sbr.rel (%p389) target = $region64
        $region63: #{tpu_custom_call.1} parent=59 // pred_region
          %p392 = scmp.lt.s32.totalorder %s23, 1
          %s393 = scalar_select %p392, %s23, 1
          %s394 = scalar_lea.vmem %s3, %s393
        $region64: #{tpu_custom_call.1} parent=59 // pred_fallthru
          _
      $region60: #{tpu_custom_call.1} parent=5 // pred_fallthru
        _
    $region6: #{tpu_custom_call.1} parent=1 // loop_footer
      %s16 = sadd.s32 1, %s12
    $region7: #{tpu_custom_call.1} parent=1 // loop_footer_branch
      %11 = sbr.rel target = $region3
    $region8: #{tpu_custom_call.1} parent=1 // loop_exit
      _
    %395 = vsyncpa [#allocation4], 1
    %s396 = scalar_lea.sflag [#allocation4], 1
    %397 = vsyncpa %s396, 1

</llo_original>
